<compile_context>
chip_gen: v7x
topology: tpu7x:2x2x1
jax: 0.10.0
libtpu: 0.0.40
codegen_flags: <defaults>
</compile_context>

<pallas_src>
import functools
import random

import jax
import jax.numpy as jnp
import numpy as np
from jax import lax
from jax.experimental import pallas as pl
from jax.experimental.pallas import tpu as pltpu

_LANE = 128
_SUBLANE = 8
_PAIR_ALIGN = 2 * _SUBLANE              # keep block rows a multiple of 16 -> aligned halves
_TRAIN_MAX_BLOCK_ROWS = 8192            # (8192, 128) f32 = 4 MiB per pipeline buffer
_EVAL_MAX_BLOCK_ROWS = 12288            # (12288, 128) f32 = 6 MiB per pipeline buffer
_VMEM_LIMIT_BYTES = 48 * 1024 * 1024    # raise v5e's 16 MiB scoped-VMEM default

_GOLDEN = np.uint32(0x9E3779B9)
_MIX_M1 = np.uint32(0x7FEB352D)
_MIX_M2 = np.uint32(0x846CA68B)
_STREAM1 = np.uint32(0x3C6EF372)
_STREAM2 = np.uint32(0xDAA66D2B)


def _mix32(x):
    """SplitMix32-style 32-bit finalizer (lowbias32). Portable jnp uint32 ops only."""
    x = x ^ (x >> 16)
    x = x * _MIX_M1
    x = x ^ (x >> 15)
    x = x * _MIX_M2
    x = x ^ (x >> 16)
    return x


def _unit_float(bits):
    """uint32 random bits -> f32 uniform in [1.0, 2.0) via the mantissa bit-trick."""
    mant = (bits >> 9) | np.uint32(0x3F800000)
    return lax.bitcast_convert_type(mant, jnp.float32)


def _binarization_train_kernel(seed_ref, x_ref, out_ref, *, binarize,
                               noise_mean, noise_stddev):
    """Training-mode hot path: in-kernel Gaussian noise + threshold / saturated sigmoid."""
    x = x_ref[...].astype(jnp.float32)          # cast in-kernel; HBM streams native dtype

    if noise_stddev == 0.0:
        # Compile-time skip of all PRNG / Box-Muller work in the deterministic config.
        sigma_noised = x if noise_mean == 0.0 else x + noise_mean
    else:
        block_rows = x_ref.shape[0]
        # Paired Box-Muller: one uniform pair per *two* output elements; (r*cos, r*sin)
        # fill the two block halves.  Only used when the halves stay sublane-aligned;
        # tiny/odd blocks fall back to the unpaired (cos-only) form.
        paired = (block_rows % 2 == 0) and ((block_rows // 2) % _SUBLANE == 0)
        gen_rows = block_rows // 2 if paired else block_rows

        # Stateless counter-based PRNG: counter = global element index (unique per block
        # and per core), key = well-mixed seed, so nearby seeds don't overlap.
        seed = seed_ref[0].astype(jnp.uint32)
        k1 = _mix32((seed * _GOLDEN) ^ _STREAM1)
        k2 = _mix32((seed * _GOLDEN) ^ _STREAM2)

        row = lax.broadcasted_iota(jnp.int32, (gen_rows, _LANE), 0)
        col = lax.broadcasted_iota(jnp.int32, (gen_rows, _LANE), 1)
        gidx = ((pl.program_id(0) * block_rows + row) * _LANE + col).astype(jnp.uint32)

        u1 = 2.0 - _unit_float(_mix32(gidx * _GOLDEN + k1))    # (0, 1]  -> log-safe
        u2 = _unit_float(_mix32(gidx * _GOLDEN + k2)) - 1.0    # [0, 1)
        r = jnp.sqrt(-2.0 * jnp.log(u1))
        theta = (2.0 * np.pi) * u2
        if paired:
            z = jnp.concatenate([r * jnp.cos(theta), r * jnp.sin(theta)], axis=0)
        else:
            z = r * jnp.cos(theta)
        sigma_noised = x + (noise_mean + noise_stddev * z)

    if binarize:
        # Straight-through forward value: binary + sat - sat.detach() == binary, so the
        # saturated-sigmoid path is dead in the forward pass and skipped entirely.
        # TODO(synk): the straight-through *gradient* needs a custom_vjp around the
        # pallas_call; only forward semantics are reproduced here.
        out_ref[...] = (sigma_noised > 0.0).astype(jnp.float32)
    else:
        y = jax.nn.sigmoid(sigma_noised)
        out_ref[...] = jnp.clip(1.2 * y - 0.1, 0.0, 1.0)


def _binarization_eval_kernel(x_ref, out_ref):
    """Eval-mode hot path: pure thresholding (no noise operand, compare in native dtype)."""
    out_ref[...] = (x_ref[...] > 0).astype(jnp.float32)


def _tiling(n_elems, max_block_rows):
    """Return (rows, block_rows, grid): lane-dense tiling, >=2 blocks for non-tiny inputs."""
    rows = pl.cdiv(n_elems, _LANE)
    if rows <= _PAIR_ALIGN:
        # Tiny input: one block covering the whole (rows, 128) slab (block dim == full dim).
        return rows, rows, 1
    # At least 2 (and even) blocks so a "parallel" grid axis shards across both v7x TCs.
    num_blocks = max(2, pl.cdiv(rows, max_block_rows))
    if num_blocks % 2:
        num_blocks += 1
    block_rows = pl.cdiv(pl.cdiv(rows, num_blocks), _PAIR_ALIGN) * _PAIR_ALIGN
    grid = pl.cdiv(rows, block_rows)     # last block may overhang; Pallas masks the tail
    return rows, block_rows, grid


def binarization_forward(sigma,
                         *,
                         training=True,
                         binarize=None,
                         key=None,
                         seed=0,
                         noise_mean=0.0,
                         noise_stddev=1.0):
    """JAX/Pallas equivalent of BinarizationLayer.forward (forward pass only)."""
    orig_shape = sigma.shape
    flat = sigma.reshape(-1)                         # keep native dtype; cast in-kernel
    n = flat.shape[0]
    rows = pl.cdiv(n, _LANE)
    padded = rows * _LANE
    if padded != n:
        # TODO(synk): masked tail store keyed off a prefetched scalar n would make the
        # ragged path pad/crop-free; here we only pad up to the next multiple of 128.
        flat = jnp.pad(flat, (0, padded - n))
    x2d = flat.reshape(rows, _LANE)

    compiler_params = pltpu.CompilerParams(
        dimension_semantics=("parallel",),
        vmem_limit_bytes=_VMEM_LIMIT_BYTES)

    if training:
        if binarize is None:
            # Host-side coin flip mirroring PyTorch's random.random() > 0.5.
            # NOTE: under jit this is frozen at trace time; pass binarize= explicitly
            # for per-call control inside jitted code.
            binarize = random.random() > 0.5
        if key is not None:
            seed_arr = jax.random.randint(key, (1,), 0, jnp.iinfo(jnp.int32).max,
                                          dtype=jnp.int32)
        else:
            seed_arr = jnp.asarray([seed], dtype=jnp.int32)

        _, block_rows, grid = _tiling(n, _TRAIN_MAX_BLOCK_ROWS)
        kernel = functools.partial(
            _binarization_train_kernel,
            binarize=bool(binarize),
            noise_mean=float(noise_mean),
            noise_stddev=float(noise_stddev))
        out2d = pl.pallas_call(
            kernel,
            out_shape=jax.ShapeDtypeStruct((rows, _LANE), jnp.float32),
            grid_spec=pltpu.PrefetchScalarGridSpec(
                num_scalar_prefetch=1,
                grid=(grid,),
                in_specs=[pl.BlockSpec((block_rows, _LANE), lambda i, s: (i, 0))],
                out_specs=pl.BlockSpec((block_rows, _LANE), lambda i, s: (i, 0))),
            compiler_params=compiler_params,
        )(seed_arr, x2d)
    else:
        _, block_rows, grid = _tiling(n, _EVAL_MAX_BLOCK_ROWS)
        out2d = pl.pallas_call(
            _binarization_eval_kernel,
            out_shape=jax.ShapeDtypeStruct((rows, _LANE), jnp.float32),
            grid_spec=pltpu.PrefetchScalarGridSpec(
                num_scalar_prefetch=0,
                grid=(grid,),
                in_specs=[pl.BlockSpec((block_rows, _LANE), lambda i: (i, 0))],
                out_specs=pl.BlockSpec((block_rows, _LANE), lambda i: (i, 0))),
            compiler_params=compiler_params,
        )(x2d)

    out_flat = out2d.reshape(-1)
    if padded != n:
        out_flat = out_flat[:n]
    return out_flat.reshape(orig_shape)


if __name__ == "__main__":
    key = jax.random.PRNGKey(0)
    k_sigma, k_noise, k_sigma2, k_sigma3, k_sigma4 = jax.random.split(key, 5)

    # Small NCHW activation consistent with the module.
    sigma = jax.random.normal(k_sigma, (2, 4, 16, 16), dtype=jnp.float32)
    ref_eval = (sigma > 0.0).astype(jnp.float32)

    # --- eval mode: pure thresholding, exact check ---
    out_eval = jax.block_until_ready(binarization_forward(sigma, training=False))
    assert out_eval.shape == sigma.shape and out_eval.dtype == jnp.float32
    assert jnp.array_equal(out_eval, ref_eval), "eval-mode mismatch"

    # --- training, stddev=0: deterministic, exact checks of both branches ---
    out_sat0 = jax.block_until_ready(binarization_forward(
        sigma, training=True, binarize=False, key=k_noise, noise_stddev=0.0))
    ref_sat0 = jnp.clip(1.2 * jax.nn.sigmoid(sigma) - 0.1, 0.0, 1.0)
    assert jnp.allclose(out_sat0, ref_sat0, atol=2e-5), "saturated-sigmoid mismatch"

    out_bin0 = jax.block_until_ready(binarization_forward(
        sigma, training=True, binarize=True, key=k_noise, noise_stddev=0.0))
    assert jnp.array_equal(out_bin0, ref_eval), "binarize (stddev=0) mismatch"

    # --- training, stddev=1: noise generated in-kernel ---
    out_bin = jax.block_until_ready(binarization_forward(
        sigma, training=True, binarize=True, key=k_noise))
    assert bool(jnp.all((out_bin == 0.0) | (out_bin == 1.0))), "output not in {0,1}"
    assert bool(jnp.any(out_bin != ref_eval)), "noise had no effect (unexpected)"

    out_sat = jax.block_until_ready(binarization_forward(
        sigma, training=True, binarize=False, key=k_noise))
    assert bool(jnp.all((out_sat >= 0.0) & (out_sat <= 1.0))), "sat-sigmoid out of [0,1]"

    # --- Gaussian sanity: zero input + binarize -> fraction of ones ~ P(z>0) = 0.5 ---
    zeros = jnp.zeros((8, 4, 32, 32), jnp.float32)
    out_coin = jax.block_until_ready(binarization_forward(
        zeros, training=True, binarize=True, seed=1234))
    frac = float(jnp.mean(out_coin))
    assert 0.45 < frac < 0.55, f"noise looks biased: P(noise>0)={frac}"

    # --- bigger shape: multi-block grid, no padding needed ---
    sigma_big = jax.random.normal(k_sigma2, (4, 16, 72, 72), dtype=jnp.float32)
    out_big = jax.block_until_ready(binarization_forward(sigma_big, training=False))
    assert jnp.array_equal(out_big, (sigma_big > 0.0).astype(jnp.float32)), \
        "big eval mismatch"
    out_big_tr = jax.block_until_ready(binarization_forward(
        sigma_big, training=True, binarize=False, key=k_noise, noise_stddev=0.0))
    ref_big_tr = jnp.clip(1.2 * jax.nn.sigmoid(sigma_big) - 0.1, 0.0, 1.0)
    assert jnp.allclose(out_big_tr, ref_big_tr, atol=2e-5), "big sat-sigmoid mismatch"

    # --- bf16 input: exercises the in-kernel cast path ---
    sigma_bf16 = sigma_big.astype(jnp.bfloat16)
    out_bf16 = jax.block_until_ready(binarization_forward(sigma_bf16, training=False))
    assert jnp.array_equal(out_bf16, (sigma_bf16 > 0).astype(jnp.float32)), \
        "bf16 eval mismatch"

    # --- ragged shape: exercises the pad/crop path ---
    sigma_odd = jax.random.normal(k_sigma3, (3, 5, 7, 11), dtype=jnp.float32)
    out_odd = jax.block_until_ready(binarization_forward(sigma_odd, training=False))
    assert jnp.array_equal(out_odd, (sigma_odd > 0.0).astype(jnp.float32)), \
        "ragged eval mismatch"
    out_odd_tr = jax.block_until_ready(binarization_forward(
        sigma_odd, training=True, binarize=False, noise_stddev=0.0))
    ref_odd_tr = jnp.clip(1.2 * jax.nn.sigmoid(sigma_odd) - 0.1, 0.0, 1.0)
    assert jnp.allclose(out_odd_tr, ref_odd_tr, atol=2e-5), "ragged sat-sigmoid mismatch"

    # --- odd-row tiny block: exercises the unpaired Box-Muller fallback with noise ---
    sigma_9r = jax.random.normal(k_sigma4, (1, 1, 9, 128), dtype=jnp.float32)
    out_9r = jax.block_until_ready(binarization_forward(
        sigma_9r, training=True, binarize=True, seed=7))
    assert bool(jnp.all((out_9r == 0.0) | (out_9r == 1.0))), "odd-row output not in {0,1}"

    print("KERNEL_OK")
</pallas_src>

<mosaic_0001>
module attributes {stable_mosaic.version = 11 : i64} {
  func.func @_binarization_eval_kernel(%arg0: i32, %arg1: memref<16x128xf32, #tpu.memory_space<vmem>>, %arg2: memref<16x128xf32, #tpu.memory_space<vmem>>) attributes {dimension_semantics = [#tpu.dimension_semantics<parallel>], iteration_bounds = array<i64: 1>, scalar_prefetch = 0 : i64, scratch_operands = 0 : i64, tpu.core_type = #tpu.core_type<tc>, window_params = [{transform_indices = @transform_0, window_bounds = array<i64: 16, 128>}, {transform_indices = @transform_1, window_bounds = array<i64: 16, 128>}]} {
    %c0 = arith.constant 0 : index
    %c0_0 = arith.constant 0 : index
    %0 = vector.load %arg1[%c0, %c0_0] : memref<16x128xf32, #tpu.memory_space<vmem>>, vector<16x128xf32>
    %cst = arith.constant 0.000000e+00 : f32
    %1 = vector.broadcast %cst : f32 to vector<16x128xf32>
    %2 = arith.cmpf ogt, %0, %1 : vector<16x128xf32>
    %3 = arith.extui %2 : vector<16x128xi1> to vector<16x128xi32>
    %4 = arith.sitofp %3 : vector<16x128xi32> to vector<16x128xf32>
    %c0_1 = arith.constant 0 : index
    %c0_2 = arith.constant 0 : index
    %5 = vector.load %arg2[%c0_1, %c0_2] : memref<16x128xf32, #tpu.memory_space<vmem>>, vector<16x128xf32>
    tpu.vector_store %arg2[%c0_1, %c0_2], %4 {strides = array<i32>} : memref<16x128xf32, #tpu.memory_space<vmem>>, vector<16x128xf32>,
    return
  }
  func.func @transform_0(%arg0: i32) -> (i32, i32) {
    %c0_i32 = arith.constant 0 : i32
    %c0_i32_0 = arith.constant 0 : i32
    return %arg0, %c0_i32 : i32, i32
  }
  func.func @transform_1(%arg0: i32) -> (i32, i32) {
    %c0_i32 = arith.constant 0 : i32
    %c0_i32_0 = arith.constant 0 : i32
    return %arg0, %c0_i32 : i32, i32
  }
}

</mosaic_0001>

<llo_original>
// kernel: tpu_custom_call.1
$region0: #{tpu_custom_call.1}
  #allocation0 [shape = 'u32[]', space=smem, size = 0x4, offset = 0x4, fixed_abs, tag = 'smem constant byte address 0x4 - core index']
  #allocation1 [shape = 'u32[144,128]{1,0:T(1,128)}', space=vmem, size = 0x12000, scoped, tag = 'internal scratch']
  %s0 = inlined_call_operand.hbm [shape: f32[16,128], index: 0, kind: input, shape index: {}]
  %s1 = inlined_call_operand.hbm [shape: f32[16,128], index: 1, kind: output, shape index: {}]
  %s2 = sld [smem:[#allocation0]]
  $region18: #{tpu_custom_call.1} parent=0
    _
  %s4 = ssub.s32 1, %s2
  %s5 = scalar_select 0, %s4, %s2
  $region1: #{tpu_custom_call.1} parent=0
    #allocation2 [shape = 'u8[8192]{0}', space=vmem, size = 0x2000, scoped, tag = 'input window, operand 0, single buffered']
    #allocation3 [shape = 's32[1]{0}', space=sflag, size = 0x4, scoped, tag = 'scoped memory for tpu_custom_call.1']
    #allocation4 [shape = 's32[1]{0}', space=sflag, size = 0x4, scoped, tag = 'scoped memory for tpu_custom_call.1']
    #allocation5 [shape = 'u8[8192]{0}', space=vmem, size = 0x2000, scoped, tag = 'output window, operand 0, single buffered']
    %6 = vsyncpa [#allocation3], 0
    %7 = vsyncpa [#allocation4], 0
    // Predicated region
    $region2: #{tpu_custom_call.1} parent=1 // pred_check
      _
    $region3: #{tpu_custom_call.1} parent=1 // pred_check_branch
      %9 = sbr.rel (0) target = $region5
    $region4: #{tpu_custom_call.1} parent=1 // pred_region
      %s11 = ssub.s32 256, 256
      %12 = vsyncadd [#allocation3], %s11
      %s13 = sshll.u32 [#allocation2], 4
      %s14 = int_to_ptr.vmem [resolvable:$true] %s13
      %19 = dma.hbm_to_vmem [thread:$0]  %s0, 256, %s14, [#allocation3], 128, 128, 8
    $region5: #{tpu_custom_call.1} parent=1 // pred_fallthru
      _
    // Predicated region
    $region6: #{tpu_custom_call.1} parent=1 // pred_check
      _
    $region7: #{tpu_custom_call.1} parent=1 // pred_check_branch
      %21 = sbr.rel (0) target = $region9
    $region8: #{tpu_custom_call.1} parent=1 // pred_region
      %22 = dma.done [#allocation3], 256
    $region9: #{tpu_custom_call.1} parent=1 // pred_fallthru
      _
    %v23 = vld [vmem:[#allocation2] sm:$0xff]
    %v24 = vld [vmem:[#allocation2 + $0x8] sm:$0xff]
    %vm25 = vcmp.gt.f32.partialorder %v23, 0.0
    %vm26 = vcmp.gt.f32.partialorder %v24, 0.0
    %v27 = vsel %vm25, 1, 0
    %v28 = vsel %vm26, 1, 0
    %v29 = vcvt.s32.f32 %v27
    %v30 = vcvt.s32.f32 %v28
    %31 = vst [vmem:[#allocation5] sm:$0xff] %v29
    %32 = vst [vmem:[#allocation5 + $0x8] sm:$0xff] %v30
    // Predicated region
    $region10: #{tpu_custom_call.1} parent=1 // pred_check
      _
    $region11: #{tpu_custom_call.1} parent=1 // pred_check_branch
      %34 = sbr.rel (0) target = $region13
    $region12: #{tpu_custom_call.1} parent=1 // pred_region
      %s36 = ssub.s32 256, 256
      %37 = vsyncadd [#allocation4], %s36
      %s38 = sshll.u32 [#allocation5], 4
      %s39 = int_to_ptr.vmem [resolvable:$true] %s38
      %44 = dma.vmem_to_hbm [thread:$0]  %s39, 256, %s1, [#allocation4], 128, 128, 8
    $region13: #{tpu_custom_call.1} parent=1 // pred_fallthru
      _
    // Predicated region
    $region14: #{tpu_custom_call.1} parent=1 // pred_check
      _
    $region15: #{tpu_custom_call.1} parent=1 // pred_check_branch
      %46 = sbr.rel (0) target = $region17
    $region16: #{tpu_custom_call.1} parent=1 // pred_region
      %47 = dma.done [#allocation4], 256
    $region17: #{tpu_custom_call.1} parent=1 // pred_fallthru
      _
    %48 = vsyncpa [#allocation3], 1
    %49 = vsyncpa [#allocation4], 1

</llo_original>
